<compile_context>
chip_gen: v7x
topology: tpu7x:2x2x1
jax: 0.10.0
libtpu: 0.0.40
codegen_flags: <defaults>
</compile_context>

<pallas_src>
import jax
import jax.numpy as jnp
from jax.experimental import pallas as pl
from jax.experimental.pallas import tpu as pltpu


def _locked_dropout_kernel(x_ref, mask_ref, o_ref):
    # x_ref:    (1, Tt, C)   one batch row, one time tile
    # mask_ref: (1, 1,  C)   per-batch locked mask (already 1/keep_prob scaled)
    # o_ref:    (1, Tt, C)
    o_ref[...] = x_ref[...] * mask_ref[...]   # sublane-broadcast over Tt


def _pick_time_tile(T, C, itemsize, budget_bytes=8 << 20):
    """Largest time tile within the per-block VMEM budget.

    Returned tile is either the full T (always a legal block extent) or a
    multiple of the dtype's native sublane tile (8 for 4-byte, 16 for 2-byte,
    32 for 1-byte dtypes) so DMAs stay dense.
    """
    sublane = {4: 8, 2: 16, 1: 32}.get(itemsize, 8)
    row_bytes = max(C * itemsize, 1)
    block_t = max(sublane, budget_bytes // row_bytes)
    block_t = (block_t // sublane) * sublane
    if block_t >= T:
        return T
    return block_t


def locked_dropout_pallas(x, *, seed, dropout=0.5, training=True,
                          batch_first=True, return_mask=False):
    """x: [B, T, C] (batch_first) or [T, B, C]; returns dropped x (and mask)."""
    if dropout == 0.0 or not training:
        if return_mask:
            xb = x if batch_first else jnp.transpose(x, (1, 0, 2))
            return x, jnp.ones((xb.shape[0], 1, xb.shape[2]), x.dtype)
        return x

    if not batch_first:
        x = jnp.transpose(x, (1, 0, 2))

    B, T, C = x.shape
    keep_prob = 1.0 - float(dropout)

    # Per-batch locked mask, generated once outside the kernel (tiny [B,1,C]).
    key = jax.random.PRNGKey(seed)
    keep = jax.random.bernoulli(key, p=keep_prob, shape=(B, 1, C))
    mask = keep.astype(x.dtype) * jnp.asarray(1.0 / keep_prob, dtype=x.dtype)

    # Pad C to a multiple of 128 so the output block is lane-dense.
    C_pad = ((C + 127) // 128) * 128
    if C_pad != C:
        pad = [(0, 0), (0, 0), (0, C_pad - C)]
        x_in = jnp.pad(x, pad)
        mask_in = jnp.pad(mask, pad)
    else:
        x_in, mask_in = x, mask

    block_t = _pick_time_tile(T, C_pad, x.dtype.itemsize)
    n_t = pl.cdiv(T, block_t)

    out = pl.pallas_call(
        _locked_dropout_kernel,
        grid=(B, n_t),
        in_specs=[
            pl.BlockSpec((1, block_t, C_pad), lambda b, t: (b, t, 0)),  # x
            pl.BlockSpec((1, 1, C_pad),       lambda b, t: (b, 0, 0)),  # mask
        ],
        out_specs=pl.BlockSpec((1, block_t, C_pad), lambda b, t: (b, t, 0)),
        out_shape=jax.ShapeDtypeStruct((B, T, C_pad), x.dtype),
        compiler_params=pltpu.CompilerParams(
            dimension_semantics=("parallel", "parallel"),
            vmem_limit_bytes=48 * 1024 * 1024,
        ),
    )(x_in, mask_in)

    if C_pad != C:
        out = out[:, :, :C]

    if not batch_first:
        out = jnp.transpose(out, (1, 0, 2))
    if return_mask:
        return out, mask
    return out


if __name__ == "__main__":
    # Small shapes consistent with the module: [batch, seq, hidden].
    B, T, C = 2, 16, 256
    dropout = 0.5
    keep_prob = 1.0 - dropout

    key = jax.random.PRNGKey(0)
    x = jax.random.normal(key, (B, T, C), dtype=jnp.float32)

    out, mask = locked_dropout_pallas(
        x, seed=1234, dropout=dropout, training=True, return_mask=True)
    jax.block_until_ready((out, mask))

    # 1) out == x * mask with the mask broadcast over time (locked property).
    ref = x * mask                      # mask: (B, 1, C) -> broadcast over T
    assert jnp.allclose(out, ref, atol=1e-6, rtol=1e-6)

    # 2) mask values are exactly {0, 1/keep_prob}.
    ok_vals = jnp.isclose(mask, 0.0) | jnp.isclose(mask, 1.0 / keep_prob)
    assert bool(jnp.all(ok_vals))

    # 3) keep rate is plausible for Bernoulli(keep_prob).
    frac_kept = float(jnp.mean((mask > 0).astype(jnp.float32)))
    assert 0.3 < frac_kept < 0.7

    # 4) deterministic for a fixed seed.
    out2, mask2 = locked_dropout_pallas(
        x, seed=1234, dropout=dropout, training=True, return_mask=True)
    assert bool(jnp.all(out == out2)) and bool(jnp.all(mask == mask2))

    # 5) eval mode / dropout == 0 are identity (no kernel launch).
    y_eval = locked_dropout_pallas(x, seed=1234, dropout=dropout, training=False)
    assert bool(jnp.all(y_eval == x))
    y_p0 = locked_dropout_pallas(x, seed=1234, dropout=0.0, training=True)
    assert bool(jnp.all(y_p0 == x))

    # 6) batch_first=False path ([T, B, C]) round-trips the transpose correctly.
    x_tbc = jnp.transpose(x, (1, 0, 2))
    out_tbc, mask_tbc = locked_dropout_pallas(
        x_tbc, seed=1234, dropout=dropout, training=True,
        batch_first=False, return_mask=True)
    assert out_tbc.shape == x_tbc.shape
    assert jnp.allclose(jnp.transpose(out_tbc, (1, 0, 2)),
                        jnp.transpose(x_tbc, (1, 0, 2)) * mask_tbc,
                        atol=1e-6, rtol=1e-6)

    # 7) non-128-multiple channel count exercises the padding path.
    x_odd = jax.random.normal(jax.random.PRNGKey(1), (B, T, 200), jnp.float32)
    out_odd, mask_odd = locked_dropout_pallas(
        x_odd, seed=7, dropout=dropout, training=True, return_mask=True)
    assert jnp.allclose(out_odd, x_odd * mask_odd, atol=1e-6, rtol=1e-6)

    print("KERNEL_OK")
</pallas_src>

<mosaic_0001>
module attributes {stable_mosaic.version = 11 : i64} {
  func.func @_locked_dropout_kernel(%arg0: i32, %arg1: i32, %arg2: memref<1x16x256xf32, #tpu.memory_space<vmem>>, %arg3: memref<1x1x256xf32, #tpu.memory_space<vmem>>, %arg4: memref<1x16x256xf32, #tpu.memory_space<vmem>>) attributes {dimension_semantics = [#tpu.dimension_semantics<parallel>, #tpu.dimension_semantics<parallel>], iteration_bounds = array<i64: 2, 1>, scalar_prefetch = 0 : i64, scratch_operands = 0 : i64, tpu.core_type = #tpu.core_type<tc>, window_params = [{transform_indices = @transform_0, window_bounds = array<i64: 1, 16, 256>}, {transform_indices = @transform_1, window_bounds = array<i64: 1, 1, 256>}, {transform_indices = @transform_2, window_bounds = array<i64: 1, 16, 256>}]} {
    %c0 = arith.constant 0 : index
    %c0_0 = arith.constant 0 : index
    %c0_1 = arith.constant 0 : index
    %0 = vector.load %arg2[%c0, %c0_0, %c0_1] : memref<1x16x256xf32, #tpu.memory_space<vmem>>, vector<1x16x256xf32>
    %c0_2 = arith.constant 0 : index
    %c0_3 = arith.constant 0 : index
    %c0_4 = arith.constant 0 : index
    %1 = vector.load %arg3[%c0_2, %c0_3, %c0_4] : memref<1x1x256xf32, #tpu.memory_space<vmem>>, vector<1x1x256xf32>
    %2 = vector.broadcast %1 : vector<1x1x256xf32> to vector<1x16x256xf32>
    %3 = arith.mulf %0, %2 : vector<1x16x256xf32>
    %c0_5 = arith.constant 0 : index
    %c0_6 = arith.constant 0 : index
    %c0_7 = arith.constant 0 : index
    %4 = vector.load %arg4[%c0_5, %c0_6, %c0_7] : memref<1x16x256xf32, #tpu.memory_space<vmem>>, vector<1x16x256xf32>
    tpu.vector_store %arg4[%c0_5, %c0_6, %c0_7], %3 {strides = array<i32>} : memref<1x16x256xf32, #tpu.memory_space<vmem>>, vector<1x16x256xf32>,
    return
  }
  func.func @transform_0(%arg0: i32, %arg1: i32) -> (i32, i32, i32) {
    %c0_i32 = arith.constant 0 : i32
    %c0_i32_0 = arith.constant 0 : i32
    return %arg0, %arg1, %c0_i32 : i32, i32, i32
  }
  func.func @transform_1(%arg0: i32, %arg1: i32) -> (i32, i32, i32) {
    %c0_i32 = arith.constant 0 : i32
    %c0_i32_0 = arith.constant 0 : i32
    %c0_i32_1 = arith.constant 0 : i32
    return %arg0, %c0_i32, %c0_i32_0 : i32, i32, i32
  }
  func.func @transform_2(%arg0: i32, %arg1: i32) -> (i32, i32, i32) {
    %c0_i32 = arith.constant 0 : i32
    %c0_i32_0 = arith.constant 0 : i32
    return %arg0, %arg1, %c0_i32 : i32, i32, i32
  }
}

</mosaic_0001>

<llo_original>
// kernel: tpu_custom_call.1
$region0: #{tpu_custom_call.1}
  #allocation0 [shape = 'u32[]', space=smem, size = 0x4, offset = 0x4, fixed_abs, tag = 'smem constant byte address 0x4 - core index']
  #allocation1 [shape = 'u32[144,128]{1,0:T(1,128)}', space=vmem, size = 0x12000, scoped, tag = 'internal scratch']
  %s0 = inlined_call_operand.hbm [shape: f32[2,16,256], index: 0, kind: input, shape index: {}]
  %s1 = inlined_call_operand.hbm [shape: f32[2,1,256], index: 1, kind: input, shape index: {}]
  %s2 = inlined_call_operand.hbm [shape: f32[2,16,256], index: 2, kind: output, shape index: {}]
  %s3 = sld [smem:[#allocation0]]
  $region49: #{tpu_custom_call.1} parent=0
    _
  %s5 = ssub.s32 1, %s3
  %s6 = scalar_select 0, %s5, %s3
  $region1: #{tpu_custom_call.1} parent=0
    #allocation2 [shape = 'u8[32768]{0}', space=vmem, size = 0x8000, scoped, tag = 'input window, operand 0']
    #allocation3 [shape = 's32[2]{0}', space=sflag, size = 0x8, scoped, tag = 'scoped memory for tpu_custom_call.1']
    #allocation4 [shape = 's32[2]{0}', space=sflag, size = 0x8, scoped, tag = 'scoped memory for tpu_custom_call.1']
    #allocation5 [shape = 'u8[2048]{0}', space=vmem, size = 0x800, scoped, tag = 'input window, operand 1']
    #allocation6 [shape = 's32[2]{0}', space=sflag, size = 0x8, scoped, tag = 'scoped memory for tpu_custom_call.1']
    #allocation7 [shape = 'u8[32768]{0}', space=vmem, size = 0x8000, scoped, tag = 'output window, operand 0']
    %7 = vsyncpa [#allocation3], 0
    %s8 = scalar_lea.sflag [#allocation3], 1
    %9 = vsyncpa %s8, 0
    %10 = vsyncpa [#allocation6], 0
    %s11 = scalar_lea.sflag [#allocation6], 1
    %12 = vsyncpa %s11, 0
    %13 = vsyncpa [#allocation4], 0
    %s14 = scalar_lea.sflag [#allocation4], 1
    %15 = vsyncpa %s14, 0
    loop: start=0, step=1, limit=4
    $region2: #{tpu_custom_call.1} parent=1 // loop_pre_header
      _
    $region3: #{tpu_custom_call.1} parent=1 // loop_header
      %s17 = sphi 0, %s21
      %p18 = scmp.ge.s32.totalorder %s17, 4
      %s24 = sphi 0, %s36
      %s25 = sphi 0, %s32
      %s26 = sphi 0, %s24
      %s27 = sphi 0, %s25
      %s28 = sphi 0, %s26
      %s29 = sphi 0, %s27
      %s41 = sphi 0, %s43
      %s44 = sphi 0, %s41
      %s45 = sphi 0, %s44
      %s61 = sphi 0, %s45
      %s67 = sphi 0, %s69
      %s70 = sphi 0, %s67
      %s71 = sphi 0, %s70
      %s87 = sphi 0, %s71
      %s95 = sphi 0, %s97
      %s98 = sphi 0, %s95
      %s99 = sphi 0, %s98
      %s115 = sphi 0, %s99
    $region4: #{tpu_custom_call.1} parent=1 // loop_header_branch
      %20 = sbr.rel (%p18) target = $region8
    $region5: #{tpu_custom_call.1} parent=1 // loop_body
      %s22 = ssub.s32 %s17, 1
      %s23 = ssub.s32 %s17, 2
      %s30 = sadd.s32 1, %s25
      %p31 = scmp.ge.s32.totalorder %s30, 1
      %s32 = scalar_select %p31, 0, %s30
      %s33 = sadd.s32 1, %s24
      %s34 = scalar_select %p31, %s33, %s24
      %p35 = scmp.ge.s32.totalorder %s34, 2
      %s36 = scalar_select %p35, 0, %s34
      %s37 = ssub.s32 %s24, %s36
      %s38 = ssub.s32 %s25, %s32
      %s39 = sor.u32 %s37, %s38
      %p40 = scmp.eq.s32.totalorder %s39, 0
      %s42 = sadd.s32 %s41, 1
      %s43 = scalar_select %p40, %s41, %s42
      %p46 = pneg %p40
      %p47 = scmp.eq.s32.totalorder %s17, 1
      %p48 = por %p46, %p47
      %p49 = scmp.ne.s32.totalorder %s41, %s44
      %p50 = scmp.eq.s32.totalorder %s17, 0
      %p51 = por %p49, %p50
      %p52 = scmp.ne.s32.totalorder %s41, %s44
      %p53 = scmp.eq.s32.totalorder %s22, 1
      %p54 = por %p52, %p53
      %p55 = scmp.ne.s32.totalorder %s44, %s45
      %p56 = scmp.eq.s32.totalorder %s22, 0
      %p57 = por %p55, %p56
      %p58 = scmp.ne.s32.totalorder %s44, %s45
      %p59 = scmp.eq.s32.totalorder %s23, 1
      %p60 = por %p58, %p59
      %p62 = scmp.ne.s32.totalorder %s45, %s61
      %p63 = scmp.eq.s32.totalorder %s23, 0
      %p64 = por %p62, %p63
      %s65 = ssub.s32 %s24, %s36
      %p66 = scmp.eq.s32.totalorder %s65, 0
      %s68 = sadd.s32 %s67, 1
      %s69 = scalar_select %p66, %s67, %s68
      %p72 = pneg %p66
      %p73 = scmp.eq.s32.totalorder %s17, 1
      %p74 = por %p72, %p73
      %p75 = scmp.ne.s32.totalorder %s67, %s70
      %p76 = scmp.eq.s32.totalorder %s17, 0
      %p77 = por %p75, %p76
      %p78 = scmp.ne.s32.totalorder %s67, %s70
      %p79 = scmp.eq.s32.totalorder %s22, 1
      %p80 = por %p78, %p79
      %p81 = scmp.ne.s32.totalorder %s70, %s71
      %p82 = scmp.eq.s32.totalorder %s22, 0
      %p83 = por %p81, %p82
      %p84 = scmp.ne.s32.totalorder %s70, %s71
      %p85 = scmp.eq.s32.totalorder %s23, 1
      %p86 = por %p84, %p85
      %p88 = scmp.ne.s32.totalorder %s71, %s87
      %p89 = scmp.eq.s32.totalorder %s23, 0
      %p90 = por %p88, %p89
      %s91 = ssub.s32 %s24, %s36
      %s92 = ssub.s32 %s25, %s32
      %s93 = sor.u32 %s91, %s92
      %p94 = scmp.eq.s32.totalorder %s93, 0
      %s96 = sadd.s32 %s95, 1
      %s97 = scalar_select %p94, %s95, %s96
      %p100 = pneg %p94
      %p101 = scmp.eq.s32.totalorder %s17, 1
      %p102 = por %p100, %p101
      %p103 = scmp.ne.s32.totalorder %s95, %s98
      %p104 = scmp.eq.s32.totalorder %s17, 0
      %p105 = por %p103, %p104
      %p106 = scmp.ne.s32.totalorder %s95, %s98
      %p107 = scmp.eq.s32.totalorder %s22, 1
      %p108 = por %p106, %p107
      %p109 = scmp.ne.s32.totalorder %s98, %s99
      %p110 = scmp.eq.s32.totalorder %s22, 0
      %p111 = por %p109, %p110
      %p112 = scmp.ne.s32.totalorder %s98, %s99
      %p113 = scmp.eq.s32.totalorder %s23, 1
      %p114 = por %p112, %p113
      %p116 = scmp.ne.s32.totalorder %s99, %s115
      %p117 = scmp.eq.s32.totalorder %s23, 0
      %p118 = por %p116, %p117
      %p119 = scmp.le.s32.totalorder 1, %s17
      %p120 = scmp.lt.s32.totalorder %s17, 3
      %p121 = pnand %p119, %p120
      %p122 = pneg %p121
      // Predicated region
      $region9: #{tpu_custom_call.1} parent=5 // pred_check
        _
      $region10: #{tpu_custom_call.1} parent=5 // pred_check_branch
        %124 = sbr.rel (%p121) target = $region12
      $region11: #{tpu_custom_call.1} parent=5 // pred_region
        %s125 = ssub.s32 %s17, 1
      $region12: #{tpu_custom_call.1} parent=5 // pred_fallthru
        _
      %p126 = scmp.lt.s32.totalorder %s17, 2
      // Predicated region
      $region13: #{tpu_custom_call.1} parent=5 // pred_check
        %p127 = pneg %p126
      $region14: #{tpu_custom_call.1} parent=5 // pred_check_branch
        %129 = sbr.rel (%p127) target = $region16
      $region15: #{tpu_custom_call.1} parent=5 // pred_region
        // Predicated region
        $region17: #{tpu_custom_call.1} parent=15 // pred_check
          %p130 = pneg %p51
        $region18: #{tpu_custom_call.1} parent=15 // pred_check_branch
          %132 = sbr.rel (%p130) target = $region20
        $region19: #{tpu_custom_call.1} parent=15 // pred_region
          %s133 = sand.u32 %s41, 1
          %s134 = scalar_lea.sflag [#allocation3], %s133
          %s135 = sand.u32 %s41, 1
          %s136 = smul.addr %s135, 32
          %s137 = scalar_lea.vmem [#allocation2], %s136
          %s138 = smul.u32 2, %s25
          %s140 = ssub.s32 512, 512
          %141 = vsyncadd %s134, %s140
          %s142 = smul.addr %s138, 2
          %s143 = smul.addr %s24, 4
          %s144 = sadd.s32 %s142, %s143
          %s145 = smul.addr %s144, 128
          %s146 = scalar_lea.hbm %s0, %s145
          %s147 = sshll.u32 %s137, 4
          %s148 = int_to_ptr.vmem [resolvable:$true] %s147
          %153 = dma.hbm_to_vmem [thread:$0]  %s146, 512, %s148, %s134, 256, 256, 16
        $region20: #{tpu_custom_call.1} parent=15 // pred_fallthru
          _
        // Predicated region
        $region21: #{tpu_custom_call.1} parent=15 // pred_check
          %p154 = pneg %p77
        $region22: #{tpu_custom_call.1} parent=15 // pred_check_branch
          %156 = sbr.rel (%p154) target = $region24
        $region23: #{tpu_custom_call.1} parent=15 // pred_region
          %s157 = sand.u32 %s67, 1
          %s158 = scalar_lea.sflag [#allocation6], %s157
          %s159 = sand.u32 %s67, 1
          %s160 = smul.addr %s159, 2
          %s161 = scalar_lea.vmem [#allocation5], %s160
          %s163 = ssub.s32 32, 32
          %164 = vsyncadd %s158, %s163
          %s165 = smul.addr %s24, 2
          %s166 = smul.addr %s165, 16
          %s167 = scalar_lea.hbm %s1, %s166
          %s169 = sshll.u32 %s161, 4
          %s170 = int_to_ptr.vmem [resolvable:$true] %s169
          %172 = dma.hbm_to_vmem [thread:$0]  %s167, 32, %s170, %s158
        $region24: #{tpu_custom_call.1} parent=15 // pred_fallthru
          _
      $region16: #{tpu_custom_call.1} parent=5 // pred_fallthru
        _
      %p173 = scmp.le.s32.totalorder 1, %s17
      %p174 = scmp.lt.s32.totalorder %s17, 3
      %p175 = pnand %p173, %p174
      %p176 = pneg %p175
      // Predicated region
      $region25: #{tpu_custom_call.1} parent=5 // pred_check
        _
      $region26: #{tpu_custom_call.1} parent=5 // pred_check_branch
        %178 = sbr.rel (%p175) target = $region28
      $region27: #{tpu_custom_call.1} parent=5 // pred_region
        %s179 = ssub.s32 %s17, 1
        %s180 = sand.u32 %s44, 1
        %s181 = scalar_lea.sflag [#allocation3], %s180
        %s182 = sand.u32 %s44, 1
        %s183 = smul.addr %s182, 32
        %s184 = scalar_lea.vmem [#allocation2], %s183
        // Predicated region
        $region29: #{tpu_custom_call.1} parent=27 // pred_check
          %p185 = pneg %p57
        $region30: #{tpu_custom_call.1} parent=27 // pred_check_branch
          %187 = sbr.rel (%p185) target = $region32
        $region31: #{tpu_custom_call.1} parent=27 // pred_region
          %188 = dma.done %s181, 512
        $region32: #{tpu_custom_call.1} parent=27 // pred_fallthru
          _
        %s189 = sand.u32 %s70, 1
        %s190 = scalar_lea.sflag [#allocation6], %s189
        %s191 = sand.u32 %s70, 1
        %s192 = smul.addr %s191, 2
        %s193 = scalar_lea.vmem [#allocation5], %s192
        // Predicated region
        $region33: #{tpu_custom_call.1} parent=27 // pred_check
          %p194 = pneg %p83
        $region34: #{tpu_custom_call.1} parent=27 // pred_check_branch
          %196 = sbr.rel (%p194) target = $region36
        $region35: #{tpu_custom_call.1} parent=27 // pred_region
          %197 = dma.done %s190, 32
        $region36: #{tpu_custom_call.1} parent=27 // pred_fallthru
          _
        %s198 = sand.u32 %s44, 1
        %s199 = scalar_lea.sflag [#allocation3], %s198
        %s200 = sand.u32 %s44, 1
        %s201 = smul.addr %s200, 32
        %s202 = scalar_lea.vmem [#allocation2], %s201
        %p203 = pneg %p57
        %p204 = pneg %p54
        %s205 = sand.u32 %s70, 1
        %s206 = scalar_lea.sflag [#allocation6], %s205
        %s207 = sand.u32 %s70, 1
        %s208 = smul.addr %s207, 2
        %s209 = scalar_lea.vmem [#allocation5], %s208
        %p210 = pneg %p83
        %p211 = pneg %p80
        %p212 = pneg %p111
        %p213 = pneg %p108
        %s214 = sand.u32 %s98, 1
        %s215 = scalar_lea.sflag [#allocation4], %s214
        %s216 = sand.u32 %s98, 1
        %s217 = smul.addr %s216, 32
        %s218 = scalar_lea.vmem [#allocation7], %s217
        %s219 = smul.u32 2, %s27
        %s220 = smul.u32 2, %s27
        %v221 = vld [vmem:[%s184] sm:$0xff]
        %v222 = vld [vmem:[%s184 + $0x8] sm:$0xff]
        %v223 = vld [vmem:[%s184 + $0x10] sm:$0xff]
        %v224 = vld [vmem:[%s184 + $0x18] sm:$0xff]
        %v225 = vld [vmem:[%s193] sm:$0x3]
        %v227 = vlaneseq
        %v228 = vshrl.u32 %v227, 7
        %v229 = vsub.s32 0, %v228
        %v230 = vrot.slane %v225, %v229
        %v231 = vlaneseq
        %v232 = vshrl.u32 %v231, 7
        %v233 = vsub.s32 1, %v232
        %v234 = vrot.slane %v225, %v233
        %v237 = vmul.f32 %v221, %v230
        %v238 = vmul.f32 %v222, %v234
        %v239 = vmul.f32 %v223, %v230
        %v240 = vmul.f32 %v224, %v234
        %241 = vst [vmem:[%s218] sm:$0xff] %v237
        %242 = vst [vmem:[%s218 + $0x8] sm:$0xff] %v238
        %243 = vst [vmem:[%s218 + $0x10] sm:$0xff] %v239
        %244 = vst [vmem:[%s218 + $0x18] sm:$0xff] %v240
        %s245 = sand.u32 %s98, 1
        %s246 = scalar_lea.sflag [#allocation4], %s245
        %s247 = sand.u32 %s98, 1
        %s248 = smul.addr %s247, 32
        %s249 = scalar_lea.vmem [#allocation7], %s248
        // Predicated region
        $region37: #{tpu_custom_call.1} parent=27 // pred_check
          %p250 = pneg %p108
        $region38: #{tpu_custom_call.1} parent=27 // pred_check_branch
          %252 = sbr.rel (%p250) target = $region40
        $region39: #{tpu_custom_call.1} parent=27 // pred_region
          %s253 = smul.u32 2, %s27
          %s255 = ssub.s32 512, 512
          %256 = vsyncadd %s246, %s255
          %s257 = smul.addr %s253, 2
          %s258 = smul.addr %s26, 4
          %s259 = sadd.s32 %s257, %s258
          %s260 = smul.addr %s259, 128
          %s261 = scalar_lea.hbm %s2, %s260
          %s262 = sshll.u32 %s249, 4
          %s263 = int_to_ptr.vmem [resolvable:$true] %s262
          %268 = dma.vmem_to_hbm [thread:$0]  %s263, 512, %s261, %s246, 256, 256, 16
        $region40: #{tpu_custom_call.1} parent=27 // pred_fallthru
          _
      $region28: #{tpu_custom_call.1} parent=5 // pred_fallthru
        _
      %p269 = scmp.le.s32.totalorder 2, %s17
      // Predicated region
      $region41: #{tpu_custom_call.1} parent=5 // pred_check
        %p270 = pneg %p269
      $region42: #{tpu_custom_call.1} parent=5 // pred_check_branch
        %272 = sbr.rel (%p270) target = $region44
      $region43: #{tpu_custom_call.1} parent=5 // pred_region
        %s273 = ssub.s32 %s17, 2
        // Predicated region
        $region45: #{tpu_custom_call.1} parent=43 // pred_check
          %p274 = pneg %p114
        $region46: #{tpu_custom_call.1} parent=43 // pred_check_branch
          %276 = sbr.rel (%p274) target = $region48
        $region47: #{tpu_custom_call.1} parent=43 // pred_region
          %s277 = sand.u32 %s99, 1
          %s278 = scalar_lea.sflag [#allocation4], %s277
          %s279 = sand.u32 %s99, 1
          %s280 = smul.addr %s279, 32
          %s281 = scalar_lea.vmem [#allocation7], %s280
          %282 = dma.done %s278, 512
        $region48: #{tpu_custom_call.1} parent=43 // pred_fallthru
          _
      $region44: #{tpu_custom_call.1} parent=5 // pred_fallthru
        _
    $region6: #{tpu_custom_call.1} parent=1 // loop_footer
      %s21 = sadd.s32 1, %s17
    $region7: #{tpu_custom_call.1} parent=1 // loop_footer_branch
      %16 = sbr.rel target = $region3
    $region8: #{tpu_custom_call.1} parent=1 // loop_exit
      _
    %283 = vsyncpa [#allocation3], 1
    %s284 = scalar_lea.sflag [#allocation3], 1
    %285 = vsyncpa %s284, 1
    %286 = vsyncpa [#allocation6], 1
    %s287 = scalar_lea.sflag [#allocation6], 1
    %288 = vsyncpa %s287, 1
    %289 = vsyncpa [#allocation4], 1
    %s290 = scalar_lea.sflag [#allocation4], 1
    %291 = vsyncpa %s290, 1

</llo_original>
